<compile_context>
chip_gen: v5e
topology: v5e:2x2
jax: 0.10.0
libtpu: 0.0.40
codegen_flags: <defaults>
</compile_context>

<pallas_src>
import functools

import jax
import jax.numpy as jnp
from jax.experimental import pallas as pl
from jax.experimental.pallas import tpu as pltpu


def _cosine_activation_kernel(tau_ref, w_ref, b_ref, o_ref, *, out_features):
    # One fused (possibly block-diagonal) matmul on the MXU, f32 accumulation,
    # plus the broadcast bias add on the VPU.
    y = (
        jnp.dot(tau_ref[...], w_ref[...], preferred_element_type=jnp.float32)
        + b_ref[...]
    )  # (tm, P * out_features)
    # cos() on every lane (EUP); keep the plain affine value on the last
    # logical column of each packed group (lane % out_features == out-1).
    col = jax.lax.broadcasted_iota(jnp.int32, y.shape, 1)
    is_linear = (col % out_features) == (out_features - 1)
    o_ref[...] = jnp.where(is_linear, y, jnp.cos(y)).astype(o_ref.dtype)


def _choose_pack(n_rows, in_features, out_features, max_pack=16):
    """Largest P<=max_pack with N%P==0, (P*out)%128==0 and a modest K."""
    best = 1
    for cand in range(2, max_pack + 1):
        if n_rows % cand:
            continue
        if (cand * out_features) % 128:
            continue
        if cand * in_features > 512:  # keep the fused weight / K dimension small
            continue
        best = cand
    return best


def cosine_activation(tau, w, b, w0, b0, *, tm=1024):
    """tau: (N, in_features); returns (N, out_features) float32."""
    N, in_features = tau.shape
    out_features = w.shape[1] + 1

    # Fuse the two branches' parameters (cheap, one-time, in the wrapper).
    W = jnp.concatenate([w, w0], axis=1).astype(jnp.float32)   # (in, out)
    B = jnp.concatenate([b, b0]).astype(jnp.float32)           # (out,)

    # Lane-dense packing of P logical rows per physical row (exact rewrite).
    P = _choose_pack(N, in_features, out_features)
    if P > 1:
        W_k = jnp.kron(jnp.eye(P, dtype=jnp.float32), W)       # (P*in, P*out)
        B_k = jnp.tile(B, P)[None, :]                           # (1, P*out)
        tau_k = tau.reshape(N // P, P * in_features)            # free reshape
    else:
        W_k, B_k, tau_k = W, B[None, :], tau

    Np, Kp = tau_k.shape
    Op = W_k.shape[1]

    # Row tile: big enough to pipeline, sublane-aligned, never larger than Np.
    if tm >= Np:
        tm = Np                       # full extent is always a legal block dim
    else:
        tm = max(8, (tm // 8) * 8)    # keep the sublane dim (8, 128)-aligned

    kernel = functools.partial(_cosine_activation_kernel,
                               out_features=out_features)

    out = pl.pallas_call(
        kernel,
        out_shape=jax.ShapeDtypeStruct((Np, Op), jnp.float32),
        grid_spec=pltpu.PrefetchScalarGridSpec(
            num_scalar_prefetch=0,
            grid=(pl.cdiv(Np, tm),),
            in_specs=[
                pl.BlockSpec((tm, Kp), lambda i: (i, 0)),   # packed tau rows
                pl.BlockSpec((Kp, Op), lambda i: (0, 0)),   # fused (block-diag) W
                pl.BlockSpec((1, Op), lambda i: (0, 0)),    # fused bias
            ],
            out_specs=pl.BlockSpec((tm, Op), lambda i: (i, 0)),
        ),
        compiler_params=pltpu.CompilerParams(
            dimension_semantics=("parallel",),
        ),
    )(tau_k, W_k, B_k)

    # Un-pack: (N/P, P*out) -> (N, out) is a contiguous (free) reshape.
    return out.reshape(N, out_features)


def reference(tau, w, b, w0, b0):
    v1 = jnp.cos(jnp.matmul(tau, w) + b)
    v2 = jnp.matmul(tau, w0) + b0
    return jnp.concatenate([v1, v2], axis=-1)


if __name__ == "__main__":
    # Small shapes consistent with the module's forward:
    # tau: (batch, in_features); out_features chosen as 32.
    in_features = 8
    out_features = 32
    N = 16

    key = jax.random.PRNGKey(0)
    k_tau, k_w0, k_b0, k_w, k_b = jax.random.split(key, 5)

    tau = jax.random.normal(k_tau, (N, in_features), dtype=jnp.float32)
    # Deterministic "randn"-style parameter init (mirrors torch.randn shapes).
    w0 = jax.random.normal(k_w0, (in_features, 1), dtype=jnp.float32)
    b0 = jax.random.normal(k_b0, (1,), dtype=jnp.float32)
    w = jax.random.normal(k_w, (in_features, out_features - 1), dtype=jnp.float32)
    b = jax.random.normal(k_b, (out_features - 1,), dtype=jnp.float32)

    out = jax.block_until_ready(cosine_activation(tau, w, b, w0, b0))
    ref = reference(tau, w, b, w0, b0)
    assert out.shape == (N, out_features), out.shape
    assert jnp.allclose(out, ref, atol=1e-5, rtol=1e-5), float(
        jnp.max(jnp.abs(out - ref))
    )

    # Packed path with a multi-step / ragged grid (P=16 -> 70 packed rows,
    # tm=64 -> grid of 2 with a partial last tile).
    N2 = 16 * 70
    tau2 = jax.random.normal(jax.random.PRNGKey(1), (N2, in_features), jnp.float32)
    out2 = jax.block_until_ready(cosine_activation(tau2, w, b, w0, b0, tm=64))
    ref2 = reference(tau2, w, b, w0, b0)
    assert jnp.allclose(out2, ref2, atol=1e-5, rtol=1e-5), float(
        jnp.max(jnp.abs(out2 - ref2))
    )

    # Fallback (un-packed) path: row count with no usable pack factor,
    # multi-tile grid with a ragged last tile.
    N3 = 1037
    tau3 = jax.random.normal(jax.random.PRNGKey(2), (N3, in_features), jnp.float32)
    out3 = jax.block_until_ready(cosine_activation(tau3, w, b, w0, b0, tm=512))
    ref3 = reference(tau3, w, b, w0, b0)
    assert jnp.allclose(out3, ref3, atol=1e-5, rtol=1e-5), float(
        jnp.max(jnp.abs(out3 - ref3))
    )

    print("KERNEL_OK")
</pallas_src>

<mosaic_0001>
module attributes {stable_mosaic.version = 11 : i64} {
  func.func @_cosine_activation_kernel(%arg0: i32, %arg1: memref<1x128xf32, #tpu.memory_space<vmem>>, %arg2: memref<128x512xf32, #tpu.memory_space<vmem>>, %arg3: memref<1x512xf32, #tpu.memory_space<vmem>>, %arg4: memref<1x512xf32, #tpu.memory_space<vmem>>) attributes {dimension_semantics = [#tpu.dimension_semantics<parallel>], iteration_bounds = array<i64: 1>, scalar_prefetch = 0 : i64, scratch_operands = 0 : i64, tpu.core_type = #tpu.core_type<tc>, window_params = [{transform_indices = @transform_0, window_bounds = array<i64: 1, 128>}, {pipeline_mode = #tpu.pipeline_mode<synchronous>, transform_indices = @transform_1, window_bounds = array<i64: 128, 512>}, {pipeline_mode = #tpu.pipeline_mode<synchronous>, transform_indices = @transform_2, window_bounds = array<i64: 1, 512>}, {transform_indices = @transform_3, window_bounds = array<i64: 1, 512>}]} {
    %c0 = arith.constant 0 : index
    %c0_0 = arith.constant 0 : index
    %0 = vector.load %arg1[%c0, %c0_0] : memref<1x128xf32, #tpu.memory_space<vmem>>, vector<1x128xf32>
    %c0_1 = arith.constant 0 : index
    %c0_2 = arith.constant 0 : index
    %1 = vector.load %arg2[%c0_1, %c0_2] : memref<128x512xf32, #tpu.memory_space<vmem>>, vector<128x512xf32>
    %cst = arith.constant dense<0.000000e+00> : vector<1x512xf32>
    %2 = tpu.matmul %0, %1, %cst {dimension_numbers = #tpu.dot_dimension_numbers<[1], [0], [0], [1], [0, 0, 1, 1], [], []>} : vector<1x128xf32>, vector<128x512xf32>, vector<1x512xf32> -> vector<1x512xf32>
    %c0_3 = arith.constant 0 : index
    %c0_4 = arith.constant 0 : index
    %3 = vector.load %arg3[%c0_3, %c0_4] : memref<1x512xf32, #tpu.memory_space<vmem>>, vector<1x512xf32>
    %4 = arith.addf %2, %3 : vector<1x512xf32>
    %5 = tpu.iota {dimensions = array<i32: 1>} : vector<1x512xi32>
    %c32_i32 = arith.constant 32 : i32
    %c0_i32 = arith.constant 0 : i32
    %6 = arith.cmpi eq, %c32_i32, %c0_i32 : i32
    %c1_i32 = arith.constant 1 : i32
    %7 = arith.select %6, %c1_i32, %c32_i32 : i32
    %8 = vector.broadcast %7 : i32 to vector<1x512xi32>
    %9 = arith.remsi %5, %8 : vector<1x512xi32>
    %c0_i32_5 = arith.constant 0 : i32
    %10 = vector.broadcast %c0_i32_5 : i32 to vector<1x512xi32>
    %11 = arith.cmpi ne, %9, %10 : vector<1x512xi32>
    %c0_i32_6 = arith.constant 0 : i32
    %12 = vector.broadcast %c0_i32_6 : i32 to vector<1x512xi32>
    %13 = arith.cmpi slt, %9, %12 : vector<1x512xi32>
    %c0_i32_7 = arith.constant 0 : i32
    %14 = arith.cmpi slt, %7, %c0_i32_7 : i32
    %15 = vector.broadcast %14 : i1 to vector<1x512xi1>
    %16 = vector.broadcast %15 : vector<1x512xi1> to vector<1x512xi1>
    %17 = arith.xori %13, %16 : vector<1x512xi1>
    %18 = arith.andi %17, %11 : vector<1x512xi1>
    %19 = vector.broadcast %7 : i32 to vector<1x512xi32>
    %20 = arith.addi %9, %19 : vector<1x512xi32>
    %21 = arith.select %18, %20, %9 : vector<1x512xi1>, vector<1x512xi32>
    %c31_i32 = arith.constant 31 : i32
    %22 = vector.broadcast %c31_i32 : i32 to vector<1x512xi32>
    %23 = arith.cmpi eq, %21, %22 : vector<1x512xi32>
    %24 = math.cos %4 : vector<1x512xf32>
    %25 = arith.select %23, %4, %24 : vector<1x512xi1>, vector<1x512xf32>
    %c0_8 = arith.constant 0 : index
    %c0_9 = arith.constant 0 : index
    %26 = vector.load %arg4[%c0_8, %c0_9] : memref<1x512xf32, #tpu.memory_space<vmem>>, vector<1x512xf32>
    tpu.vector_store %arg4[%c0_8, %c0_9], %25 {strides = array<i32>} : memref<1x512xf32, #tpu.memory_space<vmem>>, vector<1x512xf32>,
    return
  }
  func.func @transform_0(%arg0: i32) -> (i32, i32) {
    %c0_i32 = arith.constant 0 : i32
    %c0_i32_0 = arith.constant 0 : i32
    return %arg0, %c0_i32 : i32, i32
  }
  func.func @transform_1(%arg0: i32) -> (i32, i32) {
    %c0_i32 = arith.constant 0 : i32
    %c0_i32_0 = arith.constant 0 : i32
    %c0_i32_1 = arith.constant 0 : i32
    return %c0_i32, %c0_i32_0 : i32, i32
  }
  func.func @transform_2(%arg0: i32) -> (i32, i32) {
    %c0_i32 = arith.constant 0 : i32
    %c0_i32_0 = arith.constant 0 : i32
    %c0_i32_1 = arith.constant 0 : i32
    return %c0_i32, %c0_i32_0 : i32, i32
  }
  func.func @transform_3(%arg0: i32) -> (i32, i32) {
    %c0_i32 = arith.constant 0 : i32
    %c0_i32_0 = arith.constant 0 : i32
    return %arg0, %c0_i32 : i32, i32
  }
}

</mosaic_0001>

<llo_original>
// kernel: tpu_custom_call.1
$region0: #{tpu_custom_call.1}
  #allocation0 [shape = 'u32[]', space=smem, size = 0x4, offset = 0x4, fixed_abs, tag = 'smem constant byte address 0x4 - core index']
  #allocation1 [shape = 'u32[72,128]{1,0:T(1,128)}', space=vmem, size = 0x9000, scoped, tag = 'internal scratch']
  %s0 = inlined_call_operand.hbm [shape: f32[1,128], index: 0, kind: input, shape index: {}]
  %s1 = inlined_call_operand.hbm [shape: f32[128,512], index: 1, kind: input, shape index: {}]
  %s2 = inlined_call_operand.hbm [shape: f32[1,512], index: 2, kind: input, shape index: {}]
  %s3 = inlined_call_operand.hbm [shape: f32[1,512], index: 3, kind: output, shape index: {}]
  %s4 = sld [smem:[#allocation0]]
  $region34: #{tpu_custom_call.1} parent=0
    _
  %s6 = ssub.s32 1, %s4
  %s7 = scalar_select 0, %s6, %s4
  $region1: #{tpu_custom_call.1} parent=0
    #allocation2 [shape = 'u8[512]{0}', space=vmem, size = 0x400, scoped, tag = 'input window, operand 0, single buffered']
    #allocation3 [shape = 's32[1]{0}', space=sflag, size = 0x4, scoped, tag = 'scoped memory for tpu_custom_call.1']
    #allocation4 [shape = 's32[1]{0}', space=sflag, size = 0x4, scoped, tag = 'scoped memory for tpu_custom_call.1']
    #allocation5 [shape = 'u8[262144]{0}', space=vmem, size = 0x40000, scoped, tag = 'input window, operand 1, single buffered']
    #allocation6 [shape = 's32[1]{0}', space=sflag, size = 0x4, scoped, tag = 'scoped memory for tpu_custom_call.1']
    #allocation7 [shape = 'u8[2048]{0}', space=vmem, size = 0x800, scoped, tag = 'input window, operand 2, single buffered']
    #allocation8 [shape = 'u8[2048]{0}', space=vmem, size = 0x800, scoped, tag = 'output window, operand 0, single buffered']
    %8 = vsyncpa [#allocation3], 0
    %9 = vsyncpa [#allocation6], 0
    %10 = vsyncpa [#allocation4], 0
    // Predicated region
    $region2: #{tpu_custom_call.1} parent=1 // pred_check
      _
    $region3: #{tpu_custom_call.1} parent=1 // pred_check_branch
      %12 = sbr.rel (0) target = $region5
    $region4: #{tpu_custom_call.1} parent=1 // pred_region
      %14 = vsyncadd [#allocation3], 0
      %s16 = sshll.u32 %s0, 4
      %s17 = int_to_ptr.hbm [resolvable:$true] %s16
      %s18 = sshll.u32 [#allocation2], 4
      %s19 = int_to_ptr.vmem [resolvable:$true] %s18
      %21 = dma.hbm_to_vmem [thread:$0]  %s17, 16, %s19, [#allocation3]
    $region5: #{tpu_custom_call.1} parent=1 // pred_fallthru
      _
    // Predicated region
    $region6: #{tpu_custom_call.1} parent=1 // pred_check
      _
    $region7: #{tpu_custom_call.1} parent=1 // pred_check_branch
      %23 = sbr.rel (0) target = $region9
    $region8: #{tpu_custom_call.1} parent=1 // pred_region
      %25 = vsyncadd [#allocation6], 0
      %s26 = sshll.u32 %s1, 4
      %s27 = int_to_ptr.hbm [resolvable:$true] %s26
      %s28 = sshll.u32 [#allocation5], 4
      %s29 = int_to_ptr.vmem [resolvable:$true] %s28
      %34 = dma.hbm_to_vmem [thread:$0]  %s27, 8192, %s29, [#allocation6], 512, 512, 32
    $region9: #{tpu_custom_call.1} parent=1 // pred_fallthru
      _
    // Predicated region
    $region10: #{tpu_custom_call.1} parent=1 // pred_check
      _
    $region11: #{tpu_custom_call.1} parent=1 // pred_check_branch
      %36 = sbr.rel (0) target = $region13
    $region12: #{tpu_custom_call.1} parent=1 // pred_region
      %38 = vsyncadd [#allocation6], 0
      %s40 = sshll.u32 %s2, 4
      %s41 = int_to_ptr.hbm [resolvable:$true] %s40
      %s42 = sshll.u32 [#allocation7], 4
      %s43 = int_to_ptr.vmem [resolvable:$true] %s42
      %45 = dma.hbm_to_vmem [thread:$0]  %s41, 64, %s43, [#allocation6]
    $region13: #{tpu_custom_call.1} parent=1 // pred_fallthru
      _
    // Predicated region
    $region14: #{tpu_custom_call.1} parent=1 // pred_check
      _
    $region15: #{tpu_custom_call.1} parent=1 // pred_check_branch
      %47 = sbr.rel (0) target = $region17
    $region16: #{tpu_custom_call.1} parent=1 // pred_region
      %49 = dma.done [#allocation3], 16
    $region17: #{tpu_custom_call.1} parent=1 // pred_fallthru
      _
    // Predicated region
    $region18: #{tpu_custom_call.1} parent=1 // pred_check
      _
    $region19: #{tpu_custom_call.1} parent=1 // pred_check_branch
      %51 = sbr.rel (0) target = $region21
    $region20: #{tpu_custom_call.1} parent=1 // pred_region
      %53 = dma.done [#allocation6], 8192
    $region21: #{tpu_custom_call.1} parent=1 // pred_fallthru
      _
    // Predicated region
    $region22: #{tpu_custom_call.1} parent=1 // pred_check
      _
    $region23: #{tpu_custom_call.1} parent=1 // pred_check_branch
      %55 = sbr.rel (0) target = $region25
    $region24: #{tpu_custom_call.1} parent=1 // pred_region
      %57 = dma.done [#allocation6], 64
    $region25: #{tpu_custom_call.1} parent=1 // pred_fallthru
      _
    %v58 = vld [vmem:[#allocation2] sm:$0x1]
    %v59 = vld [vmem:[#allocation5] sm:$0xff]
    %v60 = vld [vmem:[#allocation5 + $0x8] sm:$0xff]
    %v61 = vld [vmem:[#allocation5 + $0x10] sm:$0xff]
    %v62 = vld [vmem:[#allocation5 + $0x18] sm:$0xff]
    %v63 = vld [vmem:[#allocation5 + $0x20] sm:$0xff]
    %v64 = vld [vmem:[#allocation5 + $0x28] sm:$0xff]
    %v65 = vld [vmem:[#allocation5 + $0x30] sm:$0xff]
    %v66 = vld [vmem:[#allocation5 + $0x38] sm:$0xff]
    %v67 = vld [vmem:[#allocation5 + $0x40] sm:$0xff]
    %v68 = vld [vmem:[#allocation5 + $0x48] sm:$0xff]
    %v69 = vld [vmem:[#allocation5 + $0x50] sm:$0xff]
    %v70 = vld [vmem:[#allocation5 + $0x58] sm:$0xff]
    %v71 = vld [vmem:[#allocation5 + $0x60] sm:$0xff]
    %v72 = vld [vmem:[#allocation5 + $0x68] sm:$0xff]
    %v73 = vld [vmem:[#allocation5 + $0x70] sm:$0xff]
    %v74 = vld [vmem:[#allocation5 + $0x78] sm:$0xff]
    %v75 = vld [vmem:[#allocation5 + $0x80] sm:$0xff]
    %v76 = vld [vmem:[#allocation5 + $0x88] sm:$0xff]
    %v77 = vld [vmem:[#allocation5 + $0x90] sm:$0xff]
    %v78 = vld [vmem:[#allocation5 + $0x98] sm:$0xff]
    %v79 = vld [vmem:[#allocation5 + $0xa0] sm:$0xff]
    %v80 = vld [vmem:[#allocation5 + $0xa8] sm:$0xff]
    %v81 = vld [vmem:[#allocation5 + $0xb0] sm:$0xff]
    %v82 = vld [vmem:[#allocation5 + $0xb8] sm:$0xff]
    %v83 = vld [vmem:[#allocation5 + $0xc0] sm:$0xff]
    %v84 = vld [vmem:[#allocation5 + $0xc8] sm:$0xff]
    %v85 = vld [vmem:[#allocation5 + $0xd0] sm:$0xff]
    %v86 = vld [vmem:[#allocation5 + $0xd8] sm:$0xff]
    %v87 = vld [vmem:[#allocation5 + $0xe0] sm:$0xff]
    %v88 = vld [vmem:[#allocation5 + $0xe8] sm:$0xff]
    %v89 = vld [vmem:[#allocation5 + $0xf0] sm:$0xff]
    %v90 = vld [vmem:[#allocation5 + $0xf8] sm:$0xff]
    %v91 = vld [vmem:[#allocation5 + $0x100] sm:$0xff]
    %v92 = vld [vmem:[#allocation5 + $0x108] sm:$0xff]
    %v93 = vld [vmem:[#allocation5 + $0x110] sm:$0xff]
    %v94 = vld [vmem:[#allocation5 + $0x118] sm:$0xff]
    %v95 = vld [vmem:[#allocation5 + $0x120] sm:$0xff]
    %v96 = vld [vmem:[#allocation5 + $0x128] sm:$0xff]
    %v97 = vld [vmem:[#allocation5 + $0x130] sm:$0xff]
    %v98 = vld [vmem:[#allocation5 + $0x138] sm:$0xff]
    %v99 = vld [vmem:[#allocation5 + $0x140] sm:$0xff]
    %v100 = vld [vmem:[#allocation5 + $0x148] sm:$0xff]
    %v101 = vld [vmem:[#allocation5 + $0x150] sm:$0xff]
    %v102 = vld [vmem:[#allocation5 + $0x158] sm:$0xff]
    %v103 = vld [vmem:[#allocation5 + $0x160] sm:$0xff]
    %v104 = vld [vmem:[#allocation5 + $0x168] sm:$0xff]
    %v105 = vld [vmem:[#allocation5 + $0x170] sm:$0xff]
    %v106 = vld [vmem:[#allocation5 + $0x178] sm:$0xff]
    %v107 = vld [vmem:[#allocation5 + $0x180] sm:$0xff]
    %v108 = vld [vmem:[#allocation5 + $0x188] sm:$0xff]
    %v109 = vld [vmem:[#allocation5 + $0x190] sm:$0xff]
    %v110 = vld [vmem:[#allocation5 + $0x198] sm:$0xff]
    %v111 = vld [vmem:[#allocation5 + $0x1a0] sm:$0xff]
    %v112 = vld [vmem:[#allocation5 + $0x1a8] sm:$0xff]
    %v113 = vld [vmem:[#allocation5 + $0x1b0] sm:$0xff]
    %v114 = vld [vmem:[#allocation5 + $0x1b8] sm:$0xff]
    %v115 = vld [vmem:[#allocation5 + $0x1c0] sm:$0xff]
    %v116 = vld [vmem:[#allocation5 + $0x1c8] sm:$0xff]
    %v117 = vld [vmem:[#allocation5 + $0x1d0] sm:$0xff]
    %v118 = vld [vmem:[#allocation5 + $0x1d8] sm:$0xff]
    %v119 = vld [vmem:[#allocation5 + $0x1e0] sm:$0xff]
    %v120 = vld [vmem:[#allocation5 + $0x1e8] sm:$0xff]
    %v121 = vld [vmem:[#allocation5 + $0x1f0] sm:$0xff]
    %v122 = vld [vmem:[#allocation5 + $0x1f8] sm:$0xff]
    %v123 = vld [vmem:[#allocation7] sm:$0xf]
    %v125 = vperm.slane %v123, 0
    %v126 = vperm.slane %v123, 1
    %v127 = vperm.slane %v123, 2
    %v128 = vperm.slane %v123, 3
    %133 = vmatpush.msra.mxu0 %v119
    %134 = vmatpush.msra.mxu0 %v115
    %135 = vmatpush.msra.mxu0 %v111
    %136 = vmatpush.msra.mxu0 %v107
    %137 = vmatpush.msra.mxu0 %v103
    %138 = vmatpush.msra.mxu0 %v99
    %139 = vmatpush.msra.mxu0 %v95
    %140 = vmatpush.msra.mxu0 %v91
    %141 = vmatpush.msra.mxu0 %v87
    %142 = vmatpush.msra.mxu0 %v83
    %143 = vmatpush.msra.mxu0 %v79
    %144 = vmatpush.msra.mxu0 %v75
    %145 = vmatpush.msra.mxu0 %v71
    %146 = vmatpush.msra.mxu0 %v67
    %147 = vmatpush.msra.mxu0 %v63
    %148 = vmatpush.msra.mxu0 %v59
    %149 = vmatmul.f32.gmra.mxu0 %v58
    %v150 = vpop.f32.mrf.mxu0
    %v151 = vadd.f32 %v125, %v150
    %152 = vdwg.mxu0
    %153 = vmatpush.msra.mxu0 %v120
    %154 = vmatpush.msra.mxu0 %v116
    %155 = vmatpush.msra.mxu0 %v112
    %156 = vmatpush.msra.mxu0 %v108
    %157 = vmatpush.msra.mxu0 %v104
    %158 = vmatpush.msra.mxu0 %v100
    %159 = vmatpush.msra.mxu0 %v96
    %160 = vmatpush.msra.mxu0 %v92
    %161 = vmatpush.msra.mxu0 %v88
    %162 = vmatpush.msra.mxu0 %v84
    %163 = vmatpush.msra.mxu0 %v80
    %164 = vmatpush.msra.mxu0 %v76
    %165 = vmatpush.msra.mxu0 %v72
    %166 = vmatpush.msra.mxu0 %v68
    %167 = vmatpush.msra.mxu0 %v64
    %168 = vmatpush.msra.mxu0 %v60
    %169 = vmatmul.f32.gmra.mxu0 %v58
    %v170 = vpop.f32.mrf.mxu0
    %v171 = vadd.f32 %v126, %v170
    %172 = vdwg.mxu0
    %173 = vmatpush.msra.mxu0 %v121
    %174 = vmatpush.msra.mxu0 %v117
    %175 = vmatpush.msra.mxu0 %v113
    %176 = vmatpush.msra.mxu0 %v109
    %177 = vmatpush.msra.mxu0 %v105
    %178 = vmatpush.msra.mxu0 %v101
    %179 = vmatpush.msra.mxu0 %v97
    %180 = vmatpush.msra.mxu0 %v93
    %181 = vmatpush.msra.mxu0 %v89
    %182 = vmatpush.msra.mxu0 %v85
    %183 = vmatpush.msra.mxu0 %v81
    %184 = vmatpush.msra.mxu0 %v77
    %185 = vmatpush.msra.mxu0 %v73
    %186 = vmatpush.msra.mxu0 %v69
    %187 = vmatpush.msra.mxu0 %v65
    %188 = vmatpush.msra.mxu0 %v61
    %189 = vmatmul.f32.gmra.mxu0 %v58
    %v190 = vpop.f32.mrf.mxu0
    %v191 = vadd.f32 %v127, %v190
    %192 = vdwg.mxu0
    %193 = vmatpush.msra.mxu0 %v122
    %194 = vmatpush.msra.mxu0 %v118
    %195 = vmatpush.msra.mxu0 %v114
    %196 = vmatpush.msra.mxu0 %v110
    %197 = vmatpush.msra.mxu0 %v106
    %198 = vmatpush.msra.mxu0 %v102
    %199 = vmatpush.msra.mxu0 %v98
    %200 = vmatpush.msra.mxu0 %v94
    %201 = vmatpush.msra.mxu0 %v90
    %202 = vmatpush.msra.mxu0 %v86
    %203 = vmatpush.msra.mxu0 %v82
    %204 = vmatpush.msra.mxu0 %v78
    %205 = vmatpush.msra.mxu0 %v74
    %206 = vmatpush.msra.mxu0 %v70
    %207 = vmatpush.msra.mxu0 %v66
    %208 = vmatpush.msra.mxu0 %v62
    %209 = vmatmul.f32.gmra.mxu0 %v58
    %v210 = vpop.f32.mrf.mxu0
    %v211 = vadd.f32 %v128, %v210
    %212 = vdwg.mxu0
    %v213 = vlaneseq
    %v214 = vand.u32 %v213, 127
    %v215 = vadd.s32 %v214, 128
    %v216 = vadd.s32 %v214, 256
    %v217 = vadd.s32 %v214, 384
    %vm218 = vcmp.lt.s32.totalorder %v214, 0
    %v219 = vsub.s32 0, %v214
    %v220 = vsel %vm218, %v219, %v214
    %v221 = vshrl.u32 %v220, 5
    %v222 = vand.u32 %v220, 31
    %v223 = vsub.s32 0, %v222
    %v224 = vsel %vm218, %v223, %v222
    %vm225 = vcmp.lt.s32.totalorder %v215, 0
    %v226 = vsub.s32 0, %v215
    %v227 = vsel %vm225, %v226, %v215
    %v228 = vshrl.u32 %v227, 5
    %v229 = vand.u32 %v227, 31
    %v230 = vsub.s32 0, %v229
    %v231 = vsel %vm225, %v230, %v229
    %vm232 = vcmp.lt.s32.totalorder %v216, 0
    %v233 = vsub.s32 0, %v216
    %v234 = vsel %vm232, %v233, %v216
    %v235 = vshrl.u32 %v234, 5
    %v236 = vand.u32 %v234, 31
    %v237 = vsub.s32 0, %v236
    %v238 = vsel %vm232, %v237, %v236
    %vm239 = vcmp.lt.s32.totalorder %v217, 0
    %v240 = vsub.s32 0, %v217
    %v241 = vsel %vm239, %v240, %v217
    %v242 = vshrl.u32 %v241, 5
    %v243 = vand.u32 %v241, 31
    %v244 = vsub.s32 0, %v243
    %v245 = vsel %vm239, %v244, %v243
    %vm246 = vcmp.ne.s32.totalorder %v224, 0
    %vm247 = vcmp.ne.s32.totalorder %v231, 0
    %vm248 = vcmp.ne.s32.totalorder %v238, 0
    %vm249 = vcmp.ne.s32.totalorder %v245, 0
    %vm250 = vcmp.lt.s32.totalorder %v224, 0
    %vm251 = vcmp.lt.s32.totalorder %v231, 0
    %vm252 = vcmp.lt.s32.totalorder %v238, 0
    %vm253 = vcmp.lt.s32.totalorder %v245, 0
    %vm254 = vmand %vm250, %vm246
    %vm255 = vmand %vm251, %vm247
    %vm256 = vmand %vm252, %vm248
    %vm257 = vmand %vm253, %vm249
    %v258 = vadd.s32 %v224, 32
    %v259 = vadd.s32 %v231, 32
    %v260 = vadd.s32 %v238, 32
    %v261 = vadd.s32 %v245, 32
    %v262 = vsel %vm254, %v258, %v224
    %v263 = vsel %vm255, %v259, %v231
    %v264 = vsel %vm256, %v260, %v238
    %v265 = vsel %vm257, %v261, %v245
    %vm266 = vcmp.eq.s32.totalorder %v262, 31
    %vm267 = vcmp.eq.s32.totalorder %v263, 31
    %vm268 = vcmp.eq.s32.totalorder %v264, 31
    %vm269 = vcmp.eq.s32.totalorder %v265, 31
    %v270 = vand.u32 2147483647, %v151
    %vm271 = vcmp.le.f32.partialorder %v270, 0.7853982
    %vm272 = vcmp.lt.s32.totalorder %v151, 0
    %v273 = vand.u32 %v151, 2139095040
    %v274 = vshrl.u32 %v273, 23
    %v275 = vsub.s32 %v274, 127
    %v276 = vand.u32 2147483647, %v151
    %v277 = vand.u32 %v276, 8388607
    %v278 = vor.u32 %v277, 8388608
    %v279 = vsub.s32 0, %v278
    %v280 = vadd.s32 %v275, 1
    %vm281 = vcmp.gt.s32.totalorder %v280, 0
    %v282 = vsel %vm281, %v280, 0
    %v283 = vshrl.u32 %v282, 5
    %v284 = vand.u32 %v282, 31
    %v285 = vsub.s32 32, %v284
    %v286 = vshrl.u32 683565275, %v285
    %v287 = vshll.u32 683565275, %v284
    %v288 = vshrl.u32 2475754826, %v285
    %v289 = vor.u32 %v287, %v288
    %v290 = vshll.u32 2475754826, %v284
    %v291 = vshrl.u32 2131351028, %v285
    %v292 = vor.u32 %v290, %v291
    %v293 = vshll.u32 2131351028, %v284
    %v294 = vshrl.u32 2102212464, %v285
    %v295 = vor.u32 %v293, %v294
    %v296 = vshll.u32 2102212464, %v284
    %v297 = vshrl.u32 920167782, %v285
    %v298 = vor.u32 %v296, %v297
    %v299 = vshll.u32 920167782, %v284
    %v300 = vshrl.u32 1326507024, %v285
    %v301 = vor.u32 %v299, %v300
    %vm302 = vcmp.lt.s32.totalorder %v283, 1
    %vm303 = vcmp.lt.s32.totalorder %v283, 2
    %vm304 = vcmp.lt.s32.totalorder %v283, 3
    %vm305 = vcmp.lt.s32.totalorder %v283, 4
    %v306 = vsel %vm302, %v286, %v289
    %v307 = vsel %vm305, %v295, 2102212464
    %v308 = vsel %vm304, %v292, %v307
    %v309 = vsel %vm303, %v306, %v308
    %v310 = vsel %vm302, %v289, %v292
    %v311 = vsel %vm305, %v298, 920167782
    %v312 = vsel %vm304, %v295, %v311
    %v313 = vsel %vm303, %v310, %v312
    %v314 = vsel %vm302, %v292, %v295
    %v315 = vsel %vm305, %v301, 1326507024
    %v316 = vsel %vm304, %v298, %v315
    %v317 = vsel %vm303, %v314, %v316
    %v318 = vshll.u32 %v278, 8
    %v319 = vand.u32 %v318, 65535
    %v320 = vshrl.u32 %v318, 16
    %v321 = vand.u32 %v317, 65535
    %v322 = vshrl.u32 %v317, 16
    %v323 = vmul.u32 %v319, %v321
    %v324 = vmul.u32 %v319, %v322
    %v325 = vmul.u32 %v320, %v321
    %v326 = vmul.u32 %v320, %v322
    %v327 = vshll.u32 %v324, 16
    %v328 = vshrl.u32 %v324, 16
    %v329 = vshll.u32 %v325, 16
    %v330 = vshrl.u32 %v325, 16
    %vm331 = vc.u32 %v323, %v327
    %v332 = vsel %vm331, 1, 0
    %v333 = vadd.s32 %v323, %v327
    %v334 = vadd.s32 %v326, %v332
    %vm335 = vc.u32 %v333, %v329
    %v336 = vsel %vm335, 1, 0
    %v337 = vadd.s32 %v333, %v329
    %v338 = vadd.s32 %v334, %v336
    %v339 = vadd.s32 %v338, %v328
    %v340 = vadd.s32 %v339, %v330
    %v341 = vand.u32 %v318, 65535
    %v342 = vshrl.u32 %v318, 16
    %v343 = vand.u32 %v313, 65535
    %v344 = vshrl.u32 %v313, 16
    %v345 = vmul.u32 %v341, %v343
    %v346 = vmul.u32 %v341, %v344
    %v347 = vmul.u32 %v342, %v343
    %v348 = vmul.u32 %v342, %v344
    %v349 = vshll.u32 %v346, 16
    %v350 = vshrl.u32 %v346, 16
    %v351 = vshll.u32 %v347, 16
    %v352 = vshrl.u32 %v347, 16
    %vm353 = vc.u32 %v345, %v349
    %v354 = vsel %vm353, 1, 0
    %v355 = vadd.s32 %v345, %v349
    %v356 = vadd.s32 %v348, %v354
    %vm357 = vc.u32 %v355, %v351
    %v358 = vsel %vm357, 1, 0
    %v359 = vadd.s32 %v355, %v351
    %v360 = vadd.s32 %v356, %v358
    %v361 = vadd.s32 %v360, %v350
    %v362 = vadd.s32 %v361, %v352
    %v363 = vmul.u32 %v318, %v309
    %v364 = vadd.s32 %v340, %v359
    %vm365 = vc.u32 %v340, %v359
    %v366 = vadd.s32 %v362, 1
    %v367 = vsel %vm365, %v366, %v362
    %v368 = vadd.s32 %v363, %v367
    %v369 = vadd.s32 %v368, 536870912
    %v370 = vshrl.u32 %v369, 30
    %v371 = vshll.u32 %v370, 30
    %v372 = vsub.s32 %v368, %v371
    %vm373 = vcmp.lt.s32.totalorder %v372, 0
    %v374 = vsub.s32 0, %v372
    %v375 = vsel %vm373, %v374, %v372
    %v376 = vclz %v375
    %v377 = vsub.s32 %v376, 2
    %vm378 = vcmp.gt.s32.totalorder 0, %v377
    %v379 = vsel %vm378, 0, %v377
    %v380 = vsub.s32 32, %v379
    %v381 = vshll.u32 %v372, %v379
    %v382 = vshrl.u32 %v364, %v380
    %v383 = vor.u32 %v381, %v382
    %v384 = vsub.s32 4294967266, %v379
    %v385 = vadd.s32 %v384, 127
    %v386 = vshll.u32 %v385, 23
    %v387 = vor.u32 4788187, %v386
    %v388 = vand.u32 2147483647, %v387
    %v390 = vcvt.s32.f32 %v383
    %v391 = vmul.f32 %v390, %v388
    %v392 = vxor.u32 %v391, 2147483648
    %v393 = vsel %vm272, %v392, %v391
    %v394 = vsub.s32 4, %v370
    %v395 = vsel %vm272, %v394, %v370
    %v396 = vsel %vm271, %v151, %v393
    %v397 = vsel %vm271, 0, %v395
    %v398 = vmul.f32 %v396, %v396
    %v399 = vmul.f32 %v398, -0.001358992
    %v400 = vadd.f32 %v399, 0.041655596
    %v401 = vmul.f32 %v398, %v400
    %v402 = vadd.f32 %v401, -0.4999988
    %v403 = vmul.f32 %v398, %v402
    %v404 = vadd.f32 1.0, %v403
    %v405 = vmul.f32 %v396, %v396
    %v406 = vmul.f32 %v405, -0.00019511016
    %v407 = vadd.f32 %v406, 0.008332121
    %v408 = vmul.f32 %v405, %v407
    %v409 = vadd.f32 %v408, -0.16666654
    %v410 = vmul.f32 %v405, %v409
    %v411 = vadd.f32 %v410, 1.0
    %v412 = vmul.f32 %v411, %v396
    %vm413 = vweird.f32 %v151
    %v414 = vand.u32 %v397, 3
    %vm415 = vcmp.lt.s32.totalorder %v414, 2
    %vm416 = vcmp.eq.s32.totalorder %v414, 0
    %v417 = vxor.u32 %v412, 2147483648
    %v418 = vsel %vm416, %v404, %v417
    %vm419 = vcmp.eq.s32.totalorder %v414, 2
    %v420 = vxor.u32 %v404, 2147483648
    %v421 = vsel %vm419, %v420, %v412
    %v422 = vsel %vm415, %v418, %v421
    %v423 = vsel %vm413, nan, %v422
    %v424 = vand.u32 2147483647, %v171
    %vm425 = vcmp.le.f32.partialorder %v424, 0.7853982
    %vm426 = vcmp.lt.s32.totalorder %v171, 0
    %v427 = vand.u32 %v171, 2139095040
    %v428 = vshrl.u32 %v427, 23
    %v429 = vsub.s32 %v428, 127
    %v430 = vand.u32 2147483647, %v171
    %v431 = vand.u32 %v430, 8388607
    %v432 = vor.u32 %v431, 8388608
    %v433 = vsub.s32 0, %v432
    %v434 = vadd.s32 %v429, 1
    %vm435 = vcmp.gt.s32.totalorder %v434, 0
    %v436 = vsel %vm435, %v434, 0
    %v437 = vshrl.u32 %v436, 5
    %v438 = vand.u32 %v436, 31
    %v439 = vsub.s32 32, %v438
    %v440 = vshrl.u32 683565275, %v439
    %v441 = vshll.u32 683565275, %v438
    %v442 = vshrl.u32 2475754826, %v439
    %v443 = vor.u32 %v441, %v442
    %v444 = vshll.u32 2475754826, %v438
    %v445 = vshrl.u32 2131351028, %v439
    %v446 = vor.u32 %v444, %v445
    %v447 = vshll.u32 2131351028, %v438
    %v448 = vshrl.u32 2102212464, %v439
    %v449 = vor.u32 %v447, %v448
    %v450 = vshll.u32 2102212464, %v438
    %v451 = vshrl.u32 920167782, %v439
    %v452 = vor.u32 %v450, %v451
    %v453 = vshll.u32 920167782, %v438
    %v454 = vshrl.u32 1326507024, %v439
    %v455 = vor.u32 %v453, %v454
    %vm456 = vcmp.lt.s32.totalorder %v437, 1
    %vm457 = vcmp.lt.s32.totalorder %v437, 2
    %vm458 = vcmp.lt.s32.totalorder %v437, 3
    %vm459 = vcmp.lt.s32.totalorder %v437, 4
    %v460 = vsel %vm456, %v440, %v443
    %v461 = vsel %vm459, %v449, 2102212464
    %v462 = vsel %vm458, %v446, %v461
    %v463 = vsel %vm457, %v460, %v462
    %v464 = vsel %vm456, %v443, %v446
    %v465 = vsel %vm459, %v452, 920167782
    %v466 = vsel %vm458, %v449, %v465
    %v467 = vsel %vm457, %v464, %v466
    %v468 = vsel %vm456, %v446, %v449
    %v469 = vsel %vm459, %v455, 1326507024
    %v470 = vsel %vm458, %v452, %v469
    %v471 = vsel %vm457, %v468, %v470
    %v472 = vshll.u32 %v432, 8
    %v473 = vand.u32 %v472, 65535
    %v474 = vshrl.u32 %v472, 16
    %v475 = vand.u32 %v471, 65535
    %v476 = vshrl.u32 %v471, 16
    %v477 = vmul.u32 %v473, %v475
    %v478 = vmul.u32 %v473, %v476
    %v479 = vmul.u32 %v474, %v475
    %v480 = vmul.u32 %v474, %v476
    %v481 = vshll.u32 %v478, 16
    %v482 = vshrl.u32 %v478, 16
    %v483 = vshll.u32 %v479, 16
    %v484 = vshrl.u32 %v479, 16
    %vm485 = vc.u32 %v477, %v481
    %v486 = vsel %vm485, 1, 0
    %v487 = vadd.s32 %v477, %v481
    %v488 = vadd.s32 %v480, %v486
    %vm489 = vc.u32 %v487, %v483
    %v490 = vsel %vm489, 1, 0
    %v491 = vadd.s32 %v487, %v483
    %v492 = vadd.s32 %v488, %v490
    %v493 = vadd.s32 %v492, %v482
    %v494 = vadd.s32 %v493, %v484
    %v495 = vand.u32 %v472, 65535
    %v496 = vshrl.u32 %v472, 16
    %v497 = vand.u32 %v467, 65535
    %v498 = vshrl.u32 %v467, 16
    %v499 = vmul.u32 %v495, %v497
    %v500 = vmul.u32 %v495, %v498
    %v501 = vmul.u32 %v496, %v497
    %v502 = vmul.u32 %v496, %v498
    %v503 = vshll.u32 %v500, 16
    %v504 = vshrl.u32 %v500, 16
    %v505 = vshll.u32 %v501, 16
    %v506 = vshrl.u32 %v501, 16
    %vm507 = vc.u32 %v499, %v503
    %v508 = vsel %vm507, 1, 0
    %v509 = vadd.s32 %v499, %v503
    %v510 = vadd.s32 %v502, %v508
    %vm511 = vc.u32 %v509, %v505
    %v512 = vsel %vm511, 1, 0
    %v513 = vadd.s32 %v509, %v505
    %v514 = vadd.s32 %v510, %v512
    %v515 = vadd.s32 %v514, %v504
    %v516 = vadd.s32 %v515, %v506
    %v517 = vmul.u32 %v472, %v463
    %v518 = vadd.s32 %v494, %v513
    %vm519 = vc.u32 %v494, %v513
    %v520 = vadd.s32 %v516, 1
    %v521 = vsel %vm519, %v520, %v516
    %v522 = vadd.s32 %v517, %v521
    %v523 = vadd.s32 %v522, 536870912
    %v524 = vshrl.u32 %v523, 30
    %v525 = vshll.u32 %v524, 30
    %v526 = vsub.s32 %v522, %v525
    %vm527 = vcmp.lt.s32.totalorder %v526, 0
    %v528 = vsub.s32 0, %v526
    %v529 = vsel %vm527, %v528, %v526
    %v530 = vclz %v529
    %v531 = vsub.s32 %v530, 2
    %vm532 = vcmp.gt.s32.totalorder 0, %v531
    %v533 = vsel %vm532, 0, %v531
    %v534 = vsub.s32 32, %v533
    %v535 = vshll.u32 %v526, %v533
    %v536 = vshrl.u32 %v518, %v534
    %v537 = vor.u32 %v535, %v536
    %v538 = vsub.s32 4294967266, %v533
    %v539 = vadd.s32 %v538, 127
    %v540 = vshll.u32 %v539, 23
    %v541 = vor.u32 4788187, %v540
    %v542 = vand.u32 2147483647, %v541
    %v544 = vcvt.s32.f32 %v537
    %v545 = vmul.f32 %v544, %v542
    %v546 = vxor.u32 %v545, 2147483648
    %v547 = vsel %vm426, %v546, %v545
    %v548 = vsub.s32 4, %v524
    %v549 = vsel %vm426, %v548, %v524
    %v550 = vsel %vm425, %v171, %v547
    %v551 = vsel %vm425, 0, %v549
    %v552 = vmul.f32 %v550, %v550
    %v553 = vmul.f32 %v552, -0.001358992
    %v554 = vadd.f32 %v553, 0.041655596
    %v555 = vmul.f32 %v552, %v554
    %v556 = vadd.f32 %v555, -0.4999988
    %v557 = vmul.f32 %v552, %v556
    %v558 = vadd.f32 1.0, %v557
    %v559 = vmul.f32 %v550, %v550
    %v560 = vmul.f32 %v559, -0.00019511016
    %v561 = vadd.f32 %v560, 0.008332121
    %v562 = vmul.f32 %v559, %v561
    %v563 = vadd.f32 %v562, -0.16666654
    %v564 = vmul.f32 %v559, %v563
    %v565 = vadd.f32 %v564, 1.0
    %v566 = vmul.f32 %v565, %v550
    %vm567 = vweird.f32 %v171
    %v568 = vand.u32 %v551, 3
    %vm569 = vcmp.lt.s32.totalorder %v568, 2
    %vm570 = vcmp.eq.s32.totalorder %v568, 0
    %v571 = vxor.u32 %v566, 2147483648
    %v572 = vsel %vm570, %v558, %v571
    %vm573 = vcmp.eq.s32.totalorder %v568, 2
    %v574 = vxor.u32 %v558, 2147483648
    %v575 = vsel %vm573, %v574, %v566
    %v576 = vsel %vm569, %v572, %v575
    %v577 = vsel %vm567, nan, %v576
    %v578 = vand.u32 2147483647, %v191
    %vm579 = vcmp.le.f32.partialorder %v578, 0.7853982
    %vm580 = vcmp.lt.s32.totalorder %v191, 0
    %v581 = vand.u32 %v191, 2139095040
    %v582 = vshrl.u32 %v581, 23
    %v583 = vsub.s32 %v582, 127
    %v584 = vand.u32 2147483647, %v191
    %v585 = vand.u32 %v584, 8388607
    %v586 = vor.u32 %v585, 8388608
    %v587 = vsub.s32 0, %v586
    %v588 = vadd.s32 %v583, 1
    %vm589 = vcmp.gt.s32.totalorder %v588, 0
    %v590 = vsel %vm589, %v588, 0
    %v591 = vshrl.u32 %v590, 5
    %v592 = vand.u32 %v590, 31
    %v593 = vsub.s32 32, %v592
    %v594 = vshrl.u32 683565275, %v593
    %v595 = vshll.u32 683565275, %v592
    %v596 = vshrl.u32 2475754826, %v593
    %v597 = vor.u32 %v595, %v596
    %v598 = vshll.u32 2475754826, %v592
    %v599 = vshrl.u32 2131351028, %v593
    %v600 = vor.u32 %v598, %v599
    %v601 = vshll.u32 2131351028, %v592
    %v602 = vshrl.u32 2102212464, %v593
    %v603 = vor.u32 %v601, %v602
    %v604 = vshll.u32 2102212464, %v592
    %v605 = vshrl.u32 920167782, %v593
    %v606 = vor.u32 %v604, %v605
    %v607 = vshll.u32 920167782, %v592
    %v608 = vshrl.u32 1326507024, %v593
    %v609 = vor.u32 %v607, %v608
    %vm610 = vcmp.lt.s32.totalorder %v591, 1
    %vm611 = vcmp.lt.s32.totalorder %v591, 2
    %vm612 = vcmp.lt.s32.totalorder %v591, 3
    %vm613 = vcmp.lt.s32.totalorder %v591, 4
    %v614 = vsel %vm610, %v594, %v597
    %v615 = vsel %vm613, %v603, 2102212464
    %v616 = vsel %vm612, %v600, %v615
    %v617 = vsel %vm611, %v614, %v616
    %v618 = vsel %vm610, %v597, %v600
    %v619 = vsel %vm613, %v606, 920167782
    %v620 = vsel %vm612, %v603, %v619
    %v621 = vsel %vm611, %v618, %v620
    %v622 = vsel %vm610, %v600, %v603
    %v623 = vsel %vm613, %v609, 1326507024
    %v624 = vsel %vm612, %v606, %v623
    %v625 = vsel %vm611, %v622, %v624
    %v626 = vshll.u32 %v586, 8
    %v627 = vand.u32 %v626, 65535
    %v628 = vshrl.u32 %v626, 16
    %v629 = vand.u32 %v625, 65535
    %v630 = vshrl.u32 %v625, 16
    %v631 = vmul.u32 %v627, %v629
    %v632 = vmul.u32 %v627, %v630
    %v633 = vmul.u32 %v628, %v629
    %v634 = vmul.u32 %v628, %v630
    %v635 = vshll.u32 %v632, 16
    %v636 = vshrl.u32 %v632, 16
    %v637 = vshll.u32 %v633, 16
    %v638 = vshrl.u32 %v633, 16
    %vm639 = vc.u32 %v631, %v635
    %v640 = vsel %vm639, 1, 0
    %v641 = vadd.s32 %v631, %v635
    %v642 = vadd.s32 %v634, %v640
    %vm643 = vc.u32 %v641, %v637
    %v644 = vsel %vm643, 1, 0
    %v645 = vadd.s32 %v641, %v637
    %v646 = vadd.s32 %v642, %v644
    %v647 = vadd.s32 %v646, %v636
    %v648 = vadd.s32 %v647, %v638
    %v649 = vand.u32 %v626, 65535
    %v650 = vshrl.u32 %v626, 16
    %v651 = vand.u32 %v621, 65535
    %v652 = vshrl.u32 %v621, 16
    %v653 = vmul.u32 %v649, %v651
    %v654 = vmul.u32 %v649, %v652
    %v655 = vmul.u32 %v650, %v651
    %v656 = vmul.u32 %v650, %v652
    %v657 = vshll.u32 %v654, 16
    %v658 = vshrl.u32 %v654, 16
    %v659 = vshll.u32 %v655, 16
    %v660 = vshrl.u32 %v655, 16
    %vm661 = vc.u32 %v653, %v657
    %v662 = vsel %vm661, 1, 0
    %v663 = vadd.s32 %v653, %v657
    %v664 = vadd.s32 %v656, %v662
    %vm665 = vc.u32 %v663, %v659
    %v666 = vsel %vm665, 1, 0
    %v667 = vadd.s32 %v663, %v659
    %v668 = vadd.s32 %v664, %v666
    %v669 = vadd.s32 %v668, %v658
    %v670 = vadd.s32 %v669, %v660
    %v671 = vmul.u32 %v626, %v617
    %v672 = vadd.s32 %v648, %v667
    %vm673 = vc.u32 %v648, %v667
    %v674 = vadd.s32 %v670, 1
    %v675 = vsel %vm673, %v674, %v670
    %v676 = vadd.s32 %v671, %v675
    %v677 = vadd.s32 %v676, 536870912
    %v678 = vshrl.u32 %v677, 30
    %v679 = vshll.u32 %v678, 30
    %v680 = vsub.s32 %v676, %v679
    %vm681 = vcmp.lt.s32.totalorder %v680, 0
    %v682 = vsub.s32 0, %v680
    %v683 = vsel %vm681, %v682, %v680
    %v684 = vclz %v683
    %v685 = vsub.s32 %v684, 2
    %vm686 = vcmp.gt.s32.totalorder 0, %v685
    %v687 = vsel %vm686, 0, %v685
    %v688 = vsub.s32 32, %v687
    %v689 = vshll.u32 %v680, %v687
    %v690 = vshrl.u32 %v672, %v688
    %v691 = vor.u32 %v689, %v690
    %v692 = vsub.s32 4294967266, %v687
    %v693 = vadd.s32 %v692, 127
    %v694 = vshll.u32 %v693, 23
    %v695 = vor.u32 4788187, %v694
    %v696 = vand.u32 2147483647, %v695
    %v698 = vcvt.s32.f32 %v691
    %v699 = vmul.f32 %v698, %v696
    %v700 = vxor.u32 %v699, 2147483648
    %v701 = vsel %vm580, %v700, %v699
    %v702 = vsub.s32 4, %v678
    %v703 = vsel %vm580, %v702, %v678
    %v704 = vsel %vm579, %v191, %v701
    %v705 = vsel %vm579, 0, %v703
    %v706 = vmul.f32 %v704, %v704
    %v707 = vmul.f32 %v706, -0.001358992
    %v708 = vadd.f32 %v707, 0.041655596
    %v709 = vmul.f32 %v706, %v708
    %v710 = vadd.f32 %v709, -0.4999988
    %v711 = vmul.f32 %v706, %v710
    %v712 = vadd.f32 1.0, %v711
    %v713 = vmul.f32 %v704, %v704
    %v714 = vmul.f32 %v713, -0.00019511016
    %v715 = vadd.f32 %v714, 0.008332121
    %v716 = vmul.f32 %v713, %v715
    %v717 = vadd.f32 %v716, -0.16666654
    %v718 = vmul.f32 %v713, %v717
    %v719 = vadd.f32 %v718, 1.0
    %v720 = vmul.f32 %v719, %v704
    %vm721 = vweird.f32 %v191
    %v722 = vand.u32 %v705, 3
    %vm723 = vcmp.lt.s32.totalorder %v722, 2
    %vm724 = vcmp.eq.s32.totalorder %v722, 0
    %v725 = vxor.u32 %v720, 2147483648
    %v726 = vsel %vm724, %v712, %v725
    %vm727 = vcmp.eq.s32.totalorder %v722, 2
    %v728 = vxor.u32 %v712, 2147483648
    %v729 = vsel %vm727, %v728, %v720
    %v730 = vsel %vm723, %v726, %v729
    %v731 = vsel %vm721, nan, %v730
    %v732 = vand.u32 2147483647, %v211
    %vm733 = vcmp.le.f32.partialorder %v732, 0.7853982
    %vm734 = vcmp.lt.s32.totalorder %v211, 0
    %v735 = vand.u32 %v211, 2139095040
    %v736 = vshrl.u32 %v735, 23
    %v737 = vsub.s32 %v736, 127
    %v738 = vand.u32 2147483647, %v211
    %v739 = vand.u32 %v738, 8388607
    %v740 = vor.u32 %v739, 8388608
    %v741 = vsub.s32 0, %v740
    %v742 = vadd.s32 %v737, 1
    %vm743 = vcmp.gt.s32.totalorder %v742, 0
    %v744 = vsel %vm743, %v742, 0
    %v745 = vshrl.u32 %v744, 5
    %v746 = vand.u32 %v744, 31
    %v747 = vsub.s32 32, %v746
    %v748 = vshrl.u32 683565275, %v747
    %v749 = vshll.u32 683565275, %v746
    %v750 = vshrl.u32 2475754826, %v747
    %v751 = vor.u32 %v749, %v750
    %v752 = vshll.u32 2475754826, %v746
    %v753 = vshrl.u32 2131351028, %v747
    %v754 = vor.u32 %v752, %v753
    %v755 = vshll.u32 2131351028, %v746
    %v756 = vshrl.u32 2102212464, %v747
    %v757 = vor.u32 %v755, %v756
    %v758 = vshll.u32 2102212464, %v746
    %v759 = vshrl.u32 920167782, %v747
    %v760 = vor.u32 %v758, %v759
    %v761 = vshll.u32 920167782, %v746
    %v762 = vshrl.u32 1326507024, %v747
    %v763 = vor.u32 %v761, %v762
    %vm764 = vcmp.lt.s32.totalorder %v745, 1
    %vm765 = vcmp.lt.s32.totalorder %v745, 2
    %vm766 = vcmp.lt.s32.totalorder %v745, 3
    %vm767 = vcmp.lt.s32.totalorder %v745, 4
    %v768 = vsel %vm764, %v748, %v751
    %v769 = vsel %vm767, %v757, 2102212464
    %v770 = vsel %vm766, %v754, %v769
    %v771 = vsel %vm765, %v768, %v770
    %v772 = vsel %vm764, %v751, %v754
    %v773 = vsel %vm767, %v760, 920167782
    %v774 = vsel %vm766, %v757, %v773
    %v775 = vsel %vm765, %v772, %v774
    %v776 = vsel %vm764, %v754, %v757
    %v777 = vsel %vm767, %v763, 1326507024
    %v778 = vsel %vm766, %v760, %v777
    %v779 = vsel %vm765, %v776, %v778
    %v780 = vshll.u32 %v740, 8
    %v781 = vand.u32 %v780, 65535
    %v782 = vshrl.u32 %v780, 16
    %v783 = vand.u32 %v779, 65535
    %v784 = vshrl.u32 %v779, 16
    %v785 = vmul.u32 %v781, %v783
    %v786 = vmul.u32 %v781, %v784
    %v787 = vmul.u32 %v782, %v783
    %v788 = vmul.u32 %v782, %v784
    %v789 = vshll.u32 %v786, 16
    %v790 = vshrl.u32 %v786, 16
    %v791 = vshll.u32 %v787, 16
    %v792 = vshrl.u32 %v787, 16
    %vm793 = vc.u32 %v785, %v789
    %v794 = vsel %vm793, 1, 0
    %v795 = vadd.s32 %v785, %v789
    %v796 = vadd.s32 %v788, %v794
    %vm797 = vc.u32 %v795, %v791
    %v798 = vsel %vm797, 1, 0
    %v799 = vadd.s32 %v795, %v791
    %v800 = vadd.s32 %v796, %v798
    %v801 = vadd.s32 %v800, %v790
    %v802 = vadd.s32 %v801, %v792
    %v803 = vand.u32 %v780, 65535
    %v804 = vshrl.u32 %v780, 16
    %v805 = vand.u32 %v775, 65535
    %v806 = vshrl.u32 %v775, 16
    %v807 = vmul.u32 %v803, %v805
    %v808 = vmul.u32 %v803, %v806
    %v809 = vmul.u32 %v804, %v805
    %v810 = vmul.u32 %v804, %v806
    %v811 = vshll.u32 %v808, 16
    %v812 = vshrl.u32 %v808, 16
    %v813 = vshll.u32 %v809, 16
    %v814 = vshrl.u32 %v809, 16
    %vm815 = vc.u32 %v807, %v811
    %v816 = vsel %vm815, 1, 0
    %v817 = vadd.s32 %v807, %v811
    %v818 = vadd.s32 %v810, %v816
    %vm819 = vc.u32 %v817, %v813
    %v820 = vsel %vm819, 1, 0
    %v821 = vadd.s32 %v817, %v813
    %v822 = vadd.s32 %v818, %v820
    %v823 = vadd.s32 %v822, %v812
    %v824 = vadd.s32 %v823, %v814
    %v825 = vmul.u32 %v780, %v771
    %v826 = vadd.s32 %v802, %v821
    %vm827 = vc.u32 %v802, %v821
    %v828 = vadd.s32 %v824, 1
    %v829 = vsel %vm827, %v828, %v824
    %v830 = vadd.s32 %v825, %v829
    %v831 = vadd.s32 %v830, 536870912
    %v832 = vshrl.u32 %v831, 30
    %v833 = vshll.u32 %v832, 30
    %v834 = vsub.s32 %v830, %v833
    %vm835 = vcmp.lt.s32.totalorder %v834, 0
    %v836 = vsub.s32 0, %v834
    %v837 = vsel %vm835, %v836, %v834
    %v838 = vclz %v837
    %v839 = vsub.s32 %v838, 2
    %vm840 = vcmp.gt.s32.totalorder 0, %v839
    %v841 = vsel %vm840, 0, %v839
    %v842 = vsub.s32 32, %v841
    %v843 = vshll.u32 %v834, %v841
    %v844 = vshrl.u32 %v826, %v842
    %v845 = vor.u32 %v843, %v844
    %v846 = vsub.s32 4294967266, %v841
    %v847 = vadd.s32 %v846, 127
    %v848 = vshll.u32 %v847, 23
    %v849 = vor.u32 4788187, %v848
    %v850 = vand.u32 2147483647, %v849
    %v852 = vcvt.s32.f32 %v845
    %v853 = vmul.f32 %v852, %v850
    %v854 = vxor.u32 %v853, 2147483648
    %v855 = vsel %vm734, %v854, %v853
    %v856 = vsub.s32 4, %v832
    %v857 = vsel %vm734, %v856, %v832
    %v858 = vsel %vm733, %v211, %v855
    %v859 = vsel %vm733, 0, %v857
    %v860 = vmul.f32 %v858, %v858
    %v861 = vmul.f32 %v860, -0.001358992
    %v862 = vadd.f32 %v861, 0.041655596
    %v863 = vmul.f32 %v860, %v862
    %v864 = vadd.f32 %v863, -0.4999988
    %v865 = vmul.f32 %v860, %v864
    %v866 = vadd.f32 1.0, %v865
    %v867 = vmul.f32 %v858, %v858
    %v868 = vmul.f32 %v867, -0.00019511016
    %v869 = vadd.f32 %v868, 0.008332121
    %v870 = vmul.f32 %v867, %v869
    %v871 = vadd.f32 %v870, -0.16666654
    %v872 = vmul.f32 %v867, %v871
    %v873 = vadd.f32 %v872, 1.0
    %v874 = vmul.f32 %v873, %v858
    %vm875 = vweird.f32 %v211
    %v876 = vand.u32 %v859, 3
    %vm877 = vcmp.lt.s32.totalorder %v876, 2
    %vm878 = vcmp.eq.s32.totalorder %v876, 0
    %v879 = vxor.u32 %v874, 2147483648
    %v880 = vsel %vm878, %v866, %v879
    %vm881 = vcmp.eq.s32.totalorder %v876, 2
    %v882 = vxor.u32 %v866, 2147483648
    %v883 = vsel %vm881, %v882, %v874
    %v884 = vsel %vm877, %v880, %v883
    %v885 = vsel %vm875, nan, %v884
    %v886 = vsel %vm266, %v151, %v423
    %v887 = vsel %vm267, %v171, %v577
    %v888 = vsel %vm268, %v191, %v731
    %v889 = vsel %vm269, %v211, %v885
    %v894 = vrot.slane %v887, 7
    %v895 = vrot.slane %v888, 6
    %v896 = vrot.slane %v889, 5
    %vm897 = vcmask 1040384
    %v898 = vsel %vm897, %v886, %v894
    %vm899 = vcmask 1042434
    %v900 = vsel %vm899, %v895, %v896
    %vm901 = vcmask 1041408
    %v902 = vsel %vm901, %v898, %v900
    %v904 = vlaneseq
    %vm905 = vcmp.ge.s32.totalorder %v904, 0
    %vm906 = vcmp.lt.s32.totalorder %v904, 512
    %vm907 = vmand %vm905, %vm906
    %908 = vst.msk [vmem:[#allocation8] sm:$0xf] %vm907, %v902
    // Predicated region
    $region26: #{tpu_custom_call.1} parent=1 // pred_check
      _
    $region27: #{tpu_custom_call.1} parent=1 // pred_check_branch
      %910 = sbr.rel (0) target = $region29
    $region28: #{tpu_custom_call.1} parent=1 // pred_region
      %912 = vsyncadd [#allocation4], 0
      %s914 = sshll.u32 [#allocation8], 4
      %s915 = int_to_ptr.vmem [resolvable:$true] %s914
      %s916 = sshll.u32 %s3, 4
      %s917 = int_to_ptr.hbm [resolvable:$true] %s916
      %919 = dma.vmem_to_hbm [thread:$0]  %s915, 64, %s917, [#allocation4]
    $region29: #{tpu_custom_call.1} parent=1 // pred_fallthru
      _
    // Predicated region
    $region30: #{tpu_custom_call.1} parent=1 // pred_check
      _
    $region31: #{tpu_custom_call.1} parent=1 // pred_check_branch
      %921 = sbr.rel (0) target = $region33
    $region32: #{tpu_custom_call.1} parent=1 // pred_region
      %923 = dma.done [#allocation4], 64
    $region33: #{tpu_custom_call.1} parent=1 // pred_fallthru
      _
    %924 = vsyncpa [#allocation3], 1
    %925 = vsyncpa [#allocation6], 1
    %926 = vsyncpa [#allocation4], 1

</llo_original>
